<compile_context>
chip_gen: v6e
topology: v6e:2x2x1
jax: 0.10.0
libtpu: 0.0.40
codegen_flags: <defaults>
</compile_context>

<pallas_src>
import jax
import jax.numpy as jnp
from jax import lax
from jax.experimental import pallas as pl
from jax.experimental.pallas import tpu as pltpu


def _round_up(x: int, m: int) -> int:
    return ((x + m - 1) // m) * m


def _softplus(z):
    # Matches torch.nn.Softplus(beta=1, threshold=20):
    #   log(1 + exp(x)) for x <= 20, else x (linear region).
    # Clamp the exp argument so the linear branch never sees inf.
    return jnp.where(z > 20.0, z, jnp.log1p(jnp.exp(jnp.minimum(z, 20.0))))


def _mlp_softplus_kernel(x_ref, w1_ref, b1_ref, w2_ref, b2_ref, w3_ref, b3_ref,
                         o_ref):
    # x_ref: (TM, n_input) natural layout; o_ref: (TM, n_output) natural layout.
    # Activations are kept batch-on-lanes, shape (features, TM): MXU N = TM and
    # softplus runs on packed vregs.  Layout changes happen on-chip (MXU operand
    # feed / XLU transpose), whose slots are idle in this HBM-bound kernel.
    x = x_ref[...]                                                   # (TM, n_in)

    # Layer 1: contract feature dims of w1 (16, n_in) and x (TM, n_in) -> (16, TM).
    h = lax.dot_general(w1_ref[...], x, (((1,), (1,)), ((), ())),
                        preferred_element_type=jnp.float32)
    h = _softplus(h + b1_ref[...])                                   # (16, TM)

    # Layer 2: (16, 16) @ (16, TM) -> (16, TM).
    h = _softplus(
        jnp.dot(w2_ref[...], h, preferred_element_type=jnp.float32)
        + b2_ref[...])

    # Layer 3: (n_out, 16) @ (16, TM) -> (n_out, TM); bias + softplus in the
    # packed layout, then a single on-chip transpose to natural (TM, n_out)
    # layout so the wrapper needs no extra HBM pass over the output.
    o = _softplus(
        jnp.dot(w3_ref[...], h, preferred_element_type=jnp.float32)
        + b3_ref[...])
    o_ref[...] = o.T.astype(o_ref.dtype)                             # (TM, n_out)


def _pick_batch_tile(batch: int, cap: int = 2048) -> int:
    # Aim for >= 4 grid steps (keeps both v7x TensorCores busy and gives the DMA
    # pipeline overlap) with TM a multiple of 128 lanes; cap keeps the
    # double-buffered VMEM footprint tiny on every generation.
    tm = _round_up(max(1, -(-batch // 4)), 128)
    return max(128, min(cap, tm))


def _pallas_forward(x, params):
    w1, b1 = params["w1"], params["b1"].reshape(-1, 1)
    w2, b2 = params["w2"], params["b2"].reshape(-1, 1)
    w3, b3 = params["w3"], params["b3"].reshape(-1, 1)

    batch, n_input = x.shape
    n_output = w3.shape[0]
    tm = _pick_batch_tile(batch)
    # Partial last block is handled by Pallas -- no jnp.pad, no output slice.
    grid = (pl.cdiv(batch, tm),)

    return pl.pallas_call(
        _mlp_softplus_kernel,
        out_shape=jax.ShapeDtypeStruct((batch, n_output), jnp.float32),
        grid_spec=pltpu.PrefetchScalarGridSpec(
            num_scalar_prefetch=0,
            grid=grid,
            in_specs=[
                # Activations: natural (batch, n_input) layout, tiled on batch.
                pl.BlockSpec((tm, n_input), lambda i: (i, 0)),
                # Weights / biases: full arrays with constant block index ->
                # DMA'd once and kept VMEM-resident across grid steps.
                pl.BlockSpec(w1.shape, lambda i: (0, 0)),
                pl.BlockSpec(b1.shape, lambda i: (0, 0)),
                pl.BlockSpec(w2.shape, lambda i: (0, 0)),
                pl.BlockSpec(b2.shape, lambda i: (0, 0)),
                pl.BlockSpec(w3.shape, lambda i: (0, 0)),
                pl.BlockSpec(b3.shape, lambda i: (0, 0)),
            ],
            out_specs=pl.BlockSpec((tm, n_output), lambda i: (i, 0)),
        ),
        compiler_params=pltpu.CompilerParams(
            dimension_semantics=("parallel",)),
    )(x, w1, b1, w2, b2, w3, b3)


def _jnp_forward(x, p):
    # Pure-JAX reference / small-batch fallback (identical semantics).
    h = _softplus(x @ p["w1"].T + p["b1"])
    h = _softplus(h @ p["w2"].T + p["b2"])
    return _softplus(h @ p["w3"].T + p["b3"])


def softplus_model_forward(x, params, *, min_pallas_batch=512):
    """SoftplusModel forward: x (batch, n_input) f32 -> (batch, n_output) f32.

    Small batches go through plain jnp (XLA fuses the 16-wide MLP; the
    pallas_call launch + 128-lane padding would dominate otherwise).
    """
    if x.shape[0] < min_pallas_batch:
        return _jnp_forward(x, params)
    return _pallas_forward(x, params)


def init_params(key, n_input, n_output, hidden=16):
    """PyTorch nn.Linear layout: w (out, in), b (out,), U(+-1/sqrt(fan_in))."""
    ks = jax.random.split(key, 6)

    def linear(kw, kb, fan_in, fan_out):
        bound = 1.0 / float(fan_in) ** 0.5
        w = jax.random.uniform(kw, (fan_out, fan_in), jnp.float32, -bound, bound)
        b = jax.random.uniform(kb, (fan_out,), jnp.float32, -bound, bound)
        return w, b

    w1, b1 = linear(ks[0], ks[1], n_input, hidden)
    w2, b2 = linear(ks[2], ks[3], hidden, hidden)
    w3, b3 = linear(ks[4], ks[5], hidden, n_output)
    return dict(w1=w1, b1=b1, w2=w2, b2=b2, w3=w3, b3=b3)


if __name__ == "__main__":
    key = jax.random.PRNGKey(0)
    k_param, k_x1, k_x2 = jax.random.split(key, 3)

    n_input, n_output = 32, 8
    params = init_params(k_param, n_input, n_output)

    # Small shape, forced through the Pallas path (grid=1, partial tile).
    batch = 8
    x = jax.random.normal(k_x1, (batch, n_input), jnp.float32)
    out = jax.block_until_ready(
        softplus_model_forward(x, params, min_pallas_batch=0))
    ref = _jnp_forward(x, params)
    assert out.shape == (batch, n_output)
    assert jnp.allclose(out, ref, atol=1e-5, rtol=1e-5)

    # Same small shape through the default wrapper (jnp small-batch fallback).
    out_fb = jax.block_until_ready(softplus_model_forward(x, params))
    assert jnp.allclose(out_fb, ref, atol=1e-6, rtol=1e-6)

    # Larger, non-tile-aligned batch: Pallas path with grid=4, partial last
    # block, no padding, no wrapper transposes.
    batch2 = 1000
    x2 = jax.random.normal(k_x2, (batch2, n_input), jnp.float32)
    out2 = jax.block_until_ready(softplus_model_forward(x2, params))
    ref2 = _jnp_forward(x2, params)
    assert out2.shape == (batch2, n_output)
    assert jnp.allclose(out2, ref2, atol=1e-5, rtol=1e-5)

    print("KERNEL_OK")
</pallas_src>

<mosaic_0001>
module attributes {stable_mosaic.version = 11 : i64} {
  func.func @_mlp_softplus_kernel(%arg0: i32, %arg1: memref<128x32xf32, #tpu.memory_space<vmem>>, %arg2: memref<16x32xf32, #tpu.memory_space<vmem>>, %arg3: memref<16x1xf32, #tpu.memory_space<vmem>>, %arg4: memref<16x16xf32, #tpu.memory_space<vmem>>, %arg5: memref<16x1xf32, #tpu.memory_space<vmem>>, %arg6: memref<8x16xf32, #tpu.memory_space<vmem>>, %arg7: memref<8x1xf32, #tpu.memory_space<vmem>>, %arg8: memref<128x8xf32, #tpu.memory_space<vmem>>) attributes {dimension_semantics = [#tpu.dimension_semantics<parallel>], iteration_bounds = array<i64: 1>, scalar_prefetch = 0 : i64, scratch_operands = 0 : i64, tpu.core_type = #tpu.core_type<tc>, window_params = [{transform_indices = @transform_0, window_bounds = array<i64: 128, 32>}, {pipeline_mode = #tpu.pipeline_mode<synchronous>, transform_indices = @transform_1, window_bounds = array<i64: 16, 32>}, {pipeline_mode = #tpu.pipeline_mode<synchronous>, transform_indices = @transform_2, window_bounds = array<i64: 16, 1>}, {pipeline_mode = #tpu.pipeline_mode<synchronous>, transform_indices = @transform_3, window_bounds = array<i64: 16, 16>}, {pipeline_mode = #tpu.pipeline_mode<synchronous>, transform_indices = @transform_4, window_bounds = array<i64: 16, 1>}, {pipeline_mode = #tpu.pipeline_mode<synchronous>, transform_indices = @transform_5, window_bounds = array<i64: 8, 16>}, {pipeline_mode = #tpu.pipeline_mode<synchronous>, transform_indices = @transform_6, window_bounds = array<i64: 8, 1>}, {transform_indices = @transform_7, window_bounds = array<i64: 128, 8>}]} {
    %c0 = arith.constant 0 : index
    %c0_0 = arith.constant 0 : index
    %0 = vector.load %arg1[%c0, %c0_0] : memref<128x32xf32, #tpu.memory_space<vmem>>, vector<128x32xf32>
    %c0_1 = arith.constant 0 : index
    %c0_2 = arith.constant 0 : index
    %1 = vector.load %arg2[%c0_1, %c0_2] : memref<16x32xf32, #tpu.memory_space<vmem>>, vector<16x32xf32>
    %cst = arith.constant dense<0.000000e+00> : vector<16x128xf32>
    %2 = tpu.matmul %1, %0, %cst {dimension_numbers = #tpu.dot_dimension_numbers<[1], [1], [0], [0], [0, 0, 1, 0], [], []>} : vector<16x32xf32>, vector<128x32xf32>, vector<16x128xf32> -> vector<16x128xf32>
    %c0_3 = arith.constant 0 : index
    %c0_4 = arith.constant 0 : index
    %3 = vector.load %arg3[%c0_3, %c0_4] : memref<16x1xf32, #tpu.memory_space<vmem>>, vector<16x1xf32>
    %4 = vector.broadcast %3 : vector<16x1xf32> to vector<16x128xf32>
    %5 = arith.addf %2, %4 : vector<16x128xf32>
    %cst_5 = arith.constant 2.000000e+01 : f32
    %6 = vector.broadcast %cst_5 : f32 to vector<16x128xf32>
    %7 = arith.cmpf ogt, %5, %6 : vector<16x128xf32>
    %cst_6 = arith.constant 2.000000e+01 : f32
    %8 = vector.broadcast %cst_6 : f32 to vector<16x128xf32>
    %9 = arith.minimumf %5, %8 : vector<16x128xf32>
    %10 = math.exp %9 : vector<16x128xf32>
    %11 = math.log1p %10 : vector<16x128xf32>
    %12 = arith.select %7, %5, %11 : vector<16x128xi1>, vector<16x128xf32>
    %c0_7 = arith.constant 0 : index
    %c0_8 = arith.constant 0 : index
    %13 = vector.load %arg4[%c0_7, %c0_8] : memref<16x16xf32, #tpu.memory_space<vmem>>, vector<16x16xf32>
    %cst_9 = arith.constant dense<0.000000e+00> : vector<16x128xf32>
    %14 = tpu.matmul %13, %12, %cst_9 {dimension_numbers = #tpu.dot_dimension_numbers<[1], [0], [0], [1], [0, 0, 1, 1], [], []>} : vector<16x16xf32>, vector<16x128xf32>, vector<16x128xf32> -> vector<16x128xf32>
    %c0_10 = arith.constant 0 : index
    %c0_11 = arith.constant 0 : index
    %15 = vector.load %arg5[%c0_10, %c0_11] : memref<16x1xf32, #tpu.memory_space<vmem>>, vector<16x1xf32>
    %16 = vector.broadcast %15 : vector<16x1xf32> to vector<16x128xf32>
    %17 = arith.addf %14, %16 : vector<16x128xf32>
    %cst_12 = arith.constant 2.000000e+01 : f32
    %18 = vector.broadcast %cst_12 : f32 to vector<16x128xf32>
    %19 = arith.cmpf ogt, %17, %18 : vector<16x128xf32>
    %cst_13 = arith.constant 2.000000e+01 : f32
    %20 = vector.broadcast %cst_13 : f32 to vector<16x128xf32>
    %21 = arith.minimumf %17, %20 : vector<16x128xf32>
    %22 = math.exp %21 : vector<16x128xf32>
    %23 = math.log1p %22 : vector<16x128xf32>
    %24 = arith.select %19, %17, %23 : vector<16x128xi1>, vector<16x128xf32>
    %c0_14 = arith.constant 0 : index
    %c0_15 = arith.constant 0 : index
    %25 = vector.load %arg6[%c0_14, %c0_15] : memref<8x16xf32, #tpu.memory_space<vmem>>, vector<8x16xf32>
    %cst_16 = arith.constant dense<0.000000e+00> : vector<8x128xf32>
    %26 = tpu.matmul %25, %24, %cst_16 {dimension_numbers = #tpu.dot_dimension_numbers<[1], [0], [0], [1], [0, 0, 1, 1], [], []>} : vector<8x16xf32>, vector<16x128xf32>, vector<8x128xf32> -> vector<8x128xf32>
    %c0_17 = arith.constant 0 : index
    %c0_18 = arith.constant 0 : index
    %27 = vector.load %arg7[%c0_17, %c0_18] : memref<8x1xf32, #tpu.memory_space<vmem>>, vector<8x1xf32>
    %28 = vector.broadcast %27 : vector<8x1xf32> to vector<8x128xf32>
    %29 = arith.addf %26, %28 : vector<8x128xf32>
    %cst_19 = arith.constant 2.000000e+01 : f32
    %30 = vector.broadcast %cst_19 : f32 to vector<8x128xf32>
    %31 = arith.cmpf ogt, %29, %30 : vector<8x128xf32>
    %cst_20 = arith.constant 2.000000e+01 : f32
    %32 = vector.broadcast %cst_20 : f32 to vector<8x128xf32>
    %33 = arith.minimumf %29, %32 : vector<8x128xf32>
    %34 = math.exp %33 : vector<8x128xf32>
    %35 = math.log1p %34 : vector<8x128xf32>
    %36 = arith.select %31, %29, %35 : vector<8x128xi1>, vector<8x128xf32>
    %37 = tpu.transpose %36, [1, 0] : vector<8x128xf32> -> vector<128x8xf32>
    %c0_21 = arith.constant 0 : index
    %c0_22 = arith.constant 0 : index
    %38 = vector.load %arg8[%c0_21, %c0_22] : memref<128x8xf32, #tpu.memory_space<vmem>>, vector<128x8xf32>
    tpu.vector_store %arg8[%c0_21, %c0_22], %37 {strides = array<i32>} : memref<128x8xf32, #tpu.memory_space<vmem>>, vector<128x8xf32>,
    return
  }
  func.func @transform_0(%arg0: i32) -> (i32, i32) {
    %c0_i32 = arith.constant 0 : i32
    %c0_i32_0 = arith.constant 0 : i32
    return %arg0, %c0_i32 : i32, i32
  }
  func.func @transform_1(%arg0: i32) -> (i32, i32) {
    %c0_i32 = arith.constant 0 : i32
    %c0_i32_0 = arith.constant 0 : i32
    %c0_i32_1 = arith.constant 0 : i32
    return %c0_i32, %c0_i32_0 : i32, i32
  }
  func.func @transform_2(%arg0: i32) -> (i32, i32) {
    %c0_i32 = arith.constant 0 : i32
    %c0_i32_0 = arith.constant 0 : i32
    %c0_i32_1 = arith.constant 0 : i32
    return %c0_i32, %c0_i32_0 : i32, i32
  }
  func.func @transform_3(%arg0: i32) -> (i32, i32) {
    %c0_i32 = arith.constant 0 : i32
    %c0_i32_0 = arith.constant 0 : i32
    %c0_i32_1 = arith.constant 0 : i32
    return %c0_i32, %c0_i32_0 : i32, i32
  }
  func.func @transform_4(%arg0: i32) -> (i32, i32) {
    %c0_i32 = arith.constant 0 : i32
    %c0_i32_0 = arith.constant 0 : i32
    %c0_i32_1 = arith.constant 0 : i32
    return %c0_i32, %c0_i32_0 : i32, i32
  }
  func.func @transform_5(%arg0: i32) -> (i32, i32) {
    %c0_i32 = arith.constant 0 : i32
    %c0_i32_0 = arith.constant 0 : i32
    %c0_i32_1 = arith.constant 0 : i32
    return %c0_i32, %c0_i32_0 : i32, i32
  }
  func.func @transform_6(%arg0: i32) -> (i32, i32) {
    %c0_i32 = arith.constant 0 : i32
    %c0_i32_0 = arith.constant 0 : i32
    %c0_i32_1 = arith.constant 0 : i32
    return %c0_i32, %c0_i32_0 : i32, i32
  }
  func.func @transform_7(%arg0: i32) -> (i32, i32) {
    %c0_i32 = arith.constant 0 : i32
    %c0_i32_0 = arith.constant 0 : i32
    return %arg0, %c0_i32 : i32, i32
  }
}

</mosaic_0001>

<llo_original>
// kernel: tpu_custom_call.1
$region0: #{tpu_custom_call.1}
  #allocation0 [shape = 'u32[]', space=smem, size = 0x4, offset = 0x4, fixed_abs, tag = 'smem constant byte address 0x4 - core index']
  #allocation1 [shape = 'u32[144,128]{1,0:T(1,128)}', space=vmem, size = 0x12000, scoped, tag = 'internal scratch']
  %s0 = inlined_call_operand.vmem [shape: f32[8,32], index: 0, kind: input, shape index: {}]
  %s1 = inlined_call_operand.vmem [shape: f32[16,32], index: 1, kind: input, shape index: {}]
  %s2 = inlined_call_operand.vmem [shape: f32[16,1], index: 2, kind: input, shape index: {}]
  %s3 = inlined_call_operand.vmem [shape: f32[16,16], index: 3, kind: input, shape index: {}]
  %s4 = inlined_call_operand.vmem [shape: f32[16,1], index: 4, kind: input, shape index: {}]
  %s5 = inlined_call_operand.vmem [shape: f32[8,16], index: 5, kind: input, shape index: {}]
  %s6 = inlined_call_operand.vmem [shape: f32[8,1], index: 6, kind: input, shape index: {}]
  %s7 = inlined_call_operand.hbm [shape: f32[8,8], index: 7, kind: output, shape index: {}]
  %s8 = sld [smem:[#allocation0]]
  $region38: #{tpu_custom_call.1} parent=0
    _
  %s10 = ssub.s32 1, %s8
  %s11 = scalar_select 0, %s10, %s8
  $region1: #{tpu_custom_call.1} parent=0
    #allocation2 [shape = 'u8[65536]{0}', space=vmem, size = 0x10000, scoped, tag = 'output window, operand 0, single buffered']
    #allocation3 [shape = 's32[1]{0}', space=sflag, size = 0x4, scoped, tag = 'scoped memory for tpu_custom_call.1']
    %12 = vsyncpa [#allocation3], 0
    // Predicated region
    $region2: #{tpu_custom_call.1} parent=1 // pred_check
      _
    $region3: #{tpu_custom_call.1} parent=1 // pred_check_branch
      %14 = sbr.rel (0) target = $region5
    $region4: #{tpu_custom_call.1} parent=1 // pred_region
      _
    $region5: #{tpu_custom_call.1} parent=1 // pred_fallthru
      _
    // Predicated region
    $region6: #{tpu_custom_call.1} parent=1 // pred_check
      _
    $region7: #{tpu_custom_call.1} parent=1 // pred_check_branch
      %16 = sbr.rel (0) target = $region9
    $region8: #{tpu_custom_call.1} parent=1 // pred_region
      _
    $region9: #{tpu_custom_call.1} parent=1 // pred_fallthru
      _
    // Predicated region
    $region10: #{tpu_custom_call.1} parent=1 // pred_check
      _
    $region11: #{tpu_custom_call.1} parent=1 // pred_check_branch
      %18 = sbr.rel (0) target = $region13
    $region12: #{tpu_custom_call.1} parent=1 // pred_region
      _
    $region13: #{tpu_custom_call.1} parent=1 // pred_fallthru
      _
    // Predicated region
    $region14: #{tpu_custom_call.1} parent=1 // pred_check
      _
    $region15: #{tpu_custom_call.1} parent=1 // pred_check_branch
      %20 = sbr.rel (0) target = $region17
    $region16: #{tpu_custom_call.1} parent=1 // pred_region
      _
    $region17: #{tpu_custom_call.1} parent=1 // pred_fallthru
      _
    // Predicated region
    $region18: #{tpu_custom_call.1} parent=1 // pred_check
      _
    $region19: #{tpu_custom_call.1} parent=1 // pred_check_branch
      %22 = sbr.rel (0) target = $region21
    $region20: #{tpu_custom_call.1} parent=1 // pred_region
      _
    $region21: #{tpu_custom_call.1} parent=1 // pred_fallthru
      _
    // Predicated region
    $region22: #{tpu_custom_call.1} parent=1 // pred_check
      _
    $region23: #{tpu_custom_call.1} parent=1 // pred_check_branch
      %24 = sbr.rel (0) target = $region25
    $region24: #{tpu_custom_call.1} parent=1 // pred_region
      _
    $region25: #{tpu_custom_call.1} parent=1 // pred_fallthru
      _
    // Predicated region
    $region26: #{tpu_custom_call.1} parent=1 // pred_check
      _
    $region27: #{tpu_custom_call.1} parent=1 // pred_check_branch
      %26 = sbr.rel (0) target = $region29
    $region28: #{tpu_custom_call.1} parent=1 // pred_region
      _
    $region29: #{tpu_custom_call.1} parent=1 // pred_fallthru
      _
    %v27 = vld [vmem:[%s0] sm:$0xff]
    %v28 = vld [vmem:[%s0 + $0x8] sm:$0xff]
    %v29 = vld [vmem:[%s0 + $0x10] sm:$0xff]
    %v30 = vld [vmem:[%s0 + $0x18] sm:$0xff]
    %v31 = vld [vmem:[%s0 + $0x20] sm:$0xff]
    %v32 = vld [vmem:[%s0 + $0x28] sm:$0xff]
    %v33 = vld [vmem:[%s0 + $0x30] sm:$0xff]
    %v34 = vld [vmem:[%s0 + $0x38] sm:$0xff]
    %v35 = vld [vmem:[%s0 + $0x40] sm:$0xff]
    %v36 = vld [vmem:[%s0 + $0x48] sm:$0xff]
    %v37 = vld [vmem:[%s0 + $0x50] sm:$0xff]
    %v38 = vld [vmem:[%s0 + $0x58] sm:$0xff]
    %v39 = vld [vmem:[%s0 + $0x60] sm:$0xff]
    %v40 = vld [vmem:[%s0 + $0x68] sm:$0xff]
    %v41 = vld [vmem:[%s0 + $0x70] sm:$0xff]
    %v42 = vld [vmem:[%s0 + $0x78] sm:$0xff]
    %v43 = vld [vmem:[%s1] sm:$0xff]
    %v44 = vld [vmem:[%s1 + $0x8] sm:$0xff]
    %v45 = vld [vmem:[%s2] sm:$0xff]
    %v46 = vld [vmem:[%s2 + $0x8] sm:$0xff]
    %48 = vset.pattern.permute.xlu0 0
    %49 = vperm.xlu0 %48, %v45
    %v50 = vpop.permute.xlu0 %49
    %53 = vset.pattern.permute.xlu0 0
    %54 = vperm.xlu0 %53, %v46
    %v55 = vpop.permute.xlu0 %54
    %vm57 = vcmask 261120
    %v59 = vsel %vm57, %v43, 0
    %v62 = vsel %vm57, %v44, 0
    %v65 = vsel %vm57, %v27, 0
    %v68 = vsel %vm57, %v28, 0
    %v71 = vsel %vm57, %v29, 0
    %v74 = vsel %vm57, %v30, 0
    %v77 = vsel %vm57, %v31, 0
    %v80 = vsel %vm57, %v32, 0
    %v83 = vsel %vm57, %v33, 0
    %v86 = vsel %vm57, %v34, 0
    %v89 = vsel %vm57, %v35, 0
    %v92 = vsel %vm57, %v36, 0
    %v95 = vsel %vm57, %v37, 0
    %v98 = vsel %vm57, %v38, 0
    %v101 = vsel %vm57, %v39, 0
    %v104 = vsel %vm57, %v40, 0
    %v107 = vsel %vm57, %v41, 0
    %v110 = vsel %vm57, %v42, 0
    %112 = vmatprep.subr.mxu0 0.0
    %113 = vmatpush1.xpose.msra.mxu0 %v110
    %114 = vmatprep.subr.mxu0 0.0
    %115 = vmatpush1.xpose.msra.mxu0 %v107
    %116 = vmatprep.subr.mxu0 0.0
    %117 = vmatpush1.xpose.msra.mxu0 %v104
    %118 = vmatprep.subr.mxu0 0.0
    %119 = vmatpush1.xpose.msra.mxu0 %v101
    %120 = vmatprep.subr.mxu0 0.0
    %121 = vmatpush1.xpose.msra.mxu0 %v98
    %122 = vmatprep.subr.mxu0 0.0
    %123 = vmatpush1.xpose.msra.mxu0 %v95
    %124 = vmatprep.subr.mxu0 0.0
    %125 = vmatpush1.xpose.msra.mxu0 %v92
    %126 = vmatprep.subr.mxu0 0.0
    %127 = vmatpush1.xpose.msra.mxu0 %v89
    %128 = vmatprep.subr.mxu0 0.0
    %129 = vmatpush1.xpose.msra.mxu0 %v86
    %130 = vmatprep.subr.mxu0 0.0
    %131 = vmatpush1.xpose.msra.mxu0 %v83
    %132 = vmatprep.subr.mxu0 0.0
    %133 = vmatpush1.xpose.msra.mxu0 %v80
    %134 = vmatprep.subr.mxu0 0.0
    %135 = vmatpush1.xpose.msra.mxu0 %v77
    %136 = vmatprep.subr.mxu0 0.0
    %137 = vmatpush1.xpose.msra.mxu0 %v74
    %138 = vmatprep.subr.mxu0 0.0
    %139 = vmatpush1.xpose.msra.mxu0 %v71
    %140 = vmatprep.subr.mxu0 0.0
    %141 = vmatpush1.xpose.msra.mxu0 %v68
    %142 = vmatprep.subr.mxu0 0.0
    %143 = vmatpush1.xpose.msra.mxu0 %v65
    %144 = vmatprep.subr.mxu0 0.0
    %145 = vmatpush2.xpose.msra.mxu0 0.0
    %146 = vmatprep.subr.mxu0 0.0
    %147 = vmatpush2.xpose.msra.mxu0 0.0
    %148 = vmatprep.subr.mxu0 0.0
    %149 = vmatpush2.xpose.msra.mxu0 0.0
    %150 = vmatprep.subr.mxu0 0.0
    %151 = vmatpush2.xpose.msra.mxu0 0.0
    %152 = vmatprep.subr.mxu0 0.0
    %153 = vmatpush2.xpose.msra.mxu0 0.0
    %154 = vmatprep.subr.mxu0 0.0
    %155 = vmatpush2.xpose.msra.mxu0 0.0
    %156 = vmatprep.subr.mxu0 0.0
    %157 = vmatpush2.xpose.msra.mxu0 0.0
    %158 = vmatprep.subr.mxu0 0.0
    %159 = vmatpush2.xpose.msra.mxu0 0.0
    %160 = vmatprep.subr.mxu0 0.0
    %161 = vmatpush2.xpose.msra.mxu0 0.0
    %162 = vmatprep.subr.mxu0 0.0
    %163 = vmatpush2.xpose.msra.mxu0 0.0
    %164 = vmatprep.subr.mxu0 0.0
    %165 = vmatpush2.xpose.msra.mxu0 0.0
    %166 = vmatprep.subr.mxu0 0.0
    %167 = vmatpush2.xpose.msra.mxu0 0.0
    %168 = vmatprep.subr.mxu0 0.0
    %169 = vmatpush2.xpose.msra.mxu0 0.0
    %170 = vmatprep.subr.mxu0 0.0
    %171 = vmatpush2.xpose.msra.mxu0 0.0
    %172 = vmatprep.subr.mxu0 0.0
    %173 = vmatpush2.xpose.msra.mxu0 0.0
    %174 = vmatprep.subr.mxu0 0.0
    %175 = vmatpush2.xpose.msra.mxu0 0.0
    %176 = vmatprep.mubr.f32.mxu0 0.0
    %177 = vmatmul.mubr.f32.gmra.mxu0 %v59
    %v178 = vpop.f32.mrf.mxu0
    %v179 = vadd.f32 %v50, %v178
    %v180 = vpop.f32.mrf.mxu0
    %181 = vmatprep.mubr.f32.mxu0 0.0
    %182 = vmatmul.mubr.f32.gmra.mxu0 %v62
    %v183 = vpop.f32.mrf.mxu0
    %v184 = vadd.f32 %v55, %v183
    %v185 = vpop.f32.mrf.mxu0
    %186 = vdwg.mxu0
    %vm187 = vcmp.gt.f32.partialorder %v179, 20.0
    %vm188 = vcmp.gt.f32.partialorder %v184, 20.0
    %v189 = vmin.f32 %v179, 20.0
    %v190 = vmin.f32 %v184, 20.0
    %v191 = vmul.f32 %v189, 1.442695
    %v192 = vpow.pop %v191
    %v193 = vmul.f32 %v190, 1.442695
    %v194 = vpow.pop %v193
    %v195 = vadd.f32 %v192, 1.0
    %v196 = vlog2.pop %v195
    %v197 = vmul.f32 %v196, 0.6931472
    %v198 = vmul.f32 -0.5, %v192
    %v199 = vadd.f32 %v198, 1.0
    %v200 = vmul.f32 %v199, %v192
    %v201 = vand.u32 2147483647, %v192
    %vm202 = vcmp.lt.f32.partialorder %v201, 0.0004427343
    %v203 = vsel %vm202, %v200, %v197
    %v204 = vadd.f32 %v194, 1.0
    %v205 = vlog2.pop %v204
    %v206 = vmul.f32 %v205, 0.6931472
    %v207 = vmul.f32 -0.5, %v194
    %v208 = vadd.f32 %v207, 1.0
    %v209 = vmul.f32 %v208, %v194
    %v210 = vand.u32 2147483647, %v194
    %vm211 = vcmp.lt.f32.partialorder %v210, 0.0004427343
    %v212 = vsel %vm211, %v209, %v206
    %v213 = vsel %vm187, %v179, %v203
    %v214 = vsel %vm188, %v184, %v212
    %v215 = vld [vmem:[%s3] sm:$0xff]
    %v216 = vld [vmem:[%s3 + $0x8] sm:$0xff]
    %v217 = vld [vmem:[%s4] sm:$0xff]
    %v218 = vld [vmem:[%s4 + $0x8] sm:$0xff]
    %220 = vset.pattern.permute.xlu0 0
    %221 = vperm.xlu0 %220, %v217
    %v222 = vpop.permute.xlu0 %221
    %225 = vset.pattern.permute.xlu0 0
    %226 = vperm.xlu0 %225, %v218
    %v227 = vpop.permute.xlu0 %226
    %vm229 = vcmask 130048
    %v231 = vsel %vm229, %v215, 0
    %v234 = vsel %vm229, %v216, 0
    %236 = vmatprep.subr.mxu0 0.0
    %237 = vmatpush1.msra.mxu0 0.0
    %238 = vmatprep.subr.mxu0 0.0
    %239 = vmatpush1.msra.mxu0 0.0
    %240 = vmatprep.subr.mxu0 0.0
    %241 = vmatpush1.msra.mxu0 0.0
    %242 = vmatprep.subr.mxu0 0.0
    %243 = vmatpush1.msra.mxu0 0.0
    %244 = vmatprep.subr.mxu0 0.0
    %245 = vmatpush1.msra.mxu0 0.0
    %246 = vmatprep.subr.mxu0 0.0
    %247 = vmatpush1.msra.mxu0 0.0
    %248 = vmatprep.subr.mxu0 0.0
    %249 = vmatpush1.msra.mxu0 0.0
    %250 = vmatprep.subr.mxu0 0.0
    %251 = vmatpush1.msra.mxu0 0.0
    %252 = vmatprep.subr.mxu0 0.0
    %253 = vmatpush1.msra.mxu0 0.0
    %254 = vmatprep.subr.mxu0 0.0
    %255 = vmatpush1.msra.mxu0 0.0
    %256 = vmatprep.subr.mxu0 0.0
    %257 = vmatpush1.msra.mxu0 0.0
    %258 = vmatprep.subr.mxu0 0.0
    %259 = vmatpush1.msra.mxu0 0.0
    %260 = vmatprep.subr.mxu0 0.0
    %261 = vmatpush1.msra.mxu0 0.0
    %262 = vmatprep.subr.mxu0 0.0
    %263 = vmatpush1.msra.mxu0 0.0
    %264 = vmatprep.subr.mxu0 0.0
    %265 = vmatpush1.msra.mxu0 %v214
    %266 = vmatprep.subr.mxu0 0.0
    %267 = vmatpush1.msra.mxu0 %v213
    %268 = vmatprep.subr.mxu0 0.0
    %269 = vmatpush2.msra.mxu0 0.0
    %270 = vmatprep.subr.mxu0 0.0
    %271 = vmatpush2.msra.mxu0 0.0
    %272 = vmatprep.subr.mxu0 0.0
    %273 = vmatpush2.msra.mxu0 0.0
    %274 = vmatprep.subr.mxu0 0.0
    %275 = vmatpush2.msra.mxu0 0.0
    %276 = vmatprep.subr.mxu0 0.0
    %277 = vmatpush2.msra.mxu0 0.0
    %278 = vmatprep.subr.mxu0 0.0
    %279 = vmatpush2.msra.mxu0 0.0
    %280 = vmatprep.subr.mxu0 0.0
    %281 = vmatpush2.msra.mxu0 0.0
    %282 = vmatprep.subr.mxu0 0.0
    %283 = vmatpush2.msra.mxu0 0.0
    %284 = vmatprep.subr.mxu0 0.0
    %285 = vmatpush2.msra.mxu0 0.0
    %286 = vmatprep.subr.mxu0 0.0
    %287 = vmatpush2.msra.mxu0 0.0
    %288 = vmatprep.subr.mxu0 0.0
    %289 = vmatpush2.msra.mxu0 0.0
    %290 = vmatprep.subr.mxu0 0.0
    %291 = vmatpush2.msra.mxu0 0.0
    %292 = vmatprep.subr.mxu0 0.0
    %293 = vmatpush2.msra.mxu0 0.0
    %294 = vmatprep.subr.mxu0 0.0
    %295 = vmatpush2.msra.mxu0 0.0
    %296 = vmatprep.subr.mxu0 0.0
    %297 = vmatpush2.msra.mxu0 0.0
    %298 = vmatprep.subr.mxu0 0.0
    %299 = vmatpush2.msra.mxu0 0.0
    %300 = vmatprep.mubr.f32.mxu0 0.0
    %301 = vmatmul.mubr.f32.gmra.mxu0 %v231
    %v302 = vpop.f32.mrf.mxu0
    %v303 = vadd.f32 %v222, %v302
    %v304 = vpop.f32.mrf.mxu0
    %305 = vmatprep.mubr.f32.mxu0 0.0
    %306 = vmatmul.mubr.f32.gmra.mxu0 %v234
    %v307 = vpop.f32.mrf.mxu0
    %v308 = vadd.f32 %v227, %v307
    %v309 = vpop.f32.mrf.mxu0
    %310 = vdwg.mxu0
    %vm311 = vcmp.gt.f32.partialorder %v303, 20.0
    %vm312 = vcmp.gt.f32.partialorder %v308, 20.0
    %v313 = vmin.f32 %v303, 20.0
    %v314 = vmin.f32 %v308, 20.0
    %v315 = vmul.f32 %v313, 1.442695
    %v316 = vpow.pop %v315
    %v317 = vmul.f32 %v314, 1.442695
    %v318 = vpow.pop %v317
    %v319 = vadd.f32 %v316, 1.0
    %v320 = vlog2.pop %v319
    %v321 = vmul.f32 %v320, 0.6931472
    %v322 = vmul.f32 -0.5, %v316
    %v323 = vadd.f32 %v322, 1.0
    %v324 = vmul.f32 %v323, %v316
    %v325 = vand.u32 2147483647, %v316
    %vm326 = vcmp.lt.f32.partialorder %v325, 0.0004427343
    %v327 = vsel %vm326, %v324, %v321
    %v328 = vadd.f32 %v318, 1.0
    %v329 = vlog2.pop %v328
    %v330 = vmul.f32 %v329, 0.6931472
    %v331 = vmul.f32 -0.5, %v318
    %v332 = vadd.f32 %v331, 1.0
    %v333 = vmul.f32 %v332, %v318
    %v334 = vand.u32 2147483647, %v318
    %vm335 = vcmp.lt.f32.partialorder %v334, 0.0004427343
    %v336 = vsel %vm335, %v333, %v330
    %v337 = vsel %vm311, %v303, %v327
    %v338 = vsel %vm312, %v308, %v336
    %v339 = vld [vmem:[%s5] sm:$0xff]
    %v340 = vld [vmem:[%s6] sm:$0xff]
    %342 = vset.pattern.permute.xlu0 0
    %343 = vperm.xlu0 %342, %v340
    %v344 = vpop.permute.xlu0 %343
    %v347 = vsel %vm229, %v339, 0
    %349 = vmatprep.subr.mxu0 0.0
    %350 = vmatpush1.msra.mxu0 0.0
    %351 = vmatprep.subr.mxu0 0.0
    %352 = vmatpush1.msra.mxu0 0.0
    %353 = vmatprep.subr.mxu0 0.0
    %354 = vmatpush1.msra.mxu0 0.0
    %355 = vmatprep.subr.mxu0 0.0
    %356 = vmatpush1.msra.mxu0 0.0
    %357 = vmatprep.subr.mxu0 0.0
    %358 = vmatpush1.msra.mxu0 0.0
    %359 = vmatprep.subr.mxu0 0.0
    %360 = vmatpush1.msra.mxu0 0.0
    %361 = vmatprep.subr.mxu0 0.0
    %362 = vmatpush1.msra.mxu0 0.0
    %363 = vmatprep.subr.mxu0 0.0
    %364 = vmatpush1.msra.mxu0 0.0
    %365 = vmatprep.subr.mxu0 0.0
    %366 = vmatpush1.msra.mxu0 0.0
    %367 = vmatprep.subr.mxu0 0.0
    %368 = vmatpush1.msra.mxu0 0.0
    %369 = vmatprep.subr.mxu0 0.0
    %370 = vmatpush1.msra.mxu0 0.0
    %371 = vmatprep.subr.mxu0 0.0
    %372 = vmatpush1.msra.mxu0 0.0
    %373 = vmatprep.subr.mxu0 0.0
    %374 = vmatpush1.msra.mxu0 0.0
    %375 = vmatprep.subr.mxu0 0.0
    %376 = vmatpush1.msra.mxu0 0.0
    %377 = vmatprep.subr.mxu0 0.0
    %378 = vmatpush1.msra.mxu0 %v338
    %379 = vmatprep.subr.mxu0 0.0
    %380 = vmatpush1.msra.mxu0 %v337
    %381 = vmatprep.subr.mxu0 0.0
    %382 = vmatpush2.msra.mxu0 0.0
    %383 = vmatprep.subr.mxu0 0.0
    %384 = vmatpush2.msra.mxu0 0.0
    %385 = vmatprep.subr.mxu0 0.0
    %386 = vmatpush2.msra.mxu0 0.0
    %387 = vmatprep.subr.mxu0 0.0
    %388 = vmatpush2.msra.mxu0 0.0
    %389 = vmatprep.subr.mxu0 0.0
    %390 = vmatpush2.msra.mxu0 0.0
    %391 = vmatprep.subr.mxu0 0.0
    %392 = vmatpush2.msra.mxu0 0.0
    %393 = vmatprep.subr.mxu0 0.0
    %394 = vmatpush2.msra.mxu0 0.0
    %395 = vmatprep.subr.mxu0 0.0
    %396 = vmatpush2.msra.mxu0 0.0
    %397 = vmatprep.subr.mxu0 0.0
    %398 = vmatpush2.msra.mxu0 0.0
    %399 = vmatprep.subr.mxu0 0.0
    %400 = vmatpush2.msra.mxu0 0.0
    %401 = vmatprep.subr.mxu0 0.0
    %402 = vmatpush2.msra.mxu0 0.0
    %403 = vmatprep.subr.mxu0 0.0
    %404 = vmatpush2.msra.mxu0 0.0
    %405 = vmatprep.subr.mxu0 0.0
    %406 = vmatpush2.msra.mxu0 0.0
    %407 = vmatprep.subr.mxu0 0.0
    %408 = vmatpush2.msra.mxu0 0.0
    %409 = vmatprep.subr.mxu0 0.0
    %410 = vmatpush2.msra.mxu0 0.0
    %411 = vmatprep.subr.mxu0 0.0
    %412 = vmatpush2.msra.mxu0 0.0
    %413 = vmatprep.mubr.f32.mxu0 0.0
    %414 = vmatmul.mubr.f32.gmra.mxu0 %v347
    %v415 = vpop.f32.mrf.mxu0
    %v416 = vadd.f32 %v344, %v415
    %v417 = vpop.f32.mrf.mxu0
    %418 = vdwg.mxu0
    %vm419 = vcmp.gt.f32.partialorder %v416, 20.0
    %v420 = vmin.f32 %v416, 20.0
    %v421 = vmul.f32 %v420, 1.442695
    %v422 = vpow.pop %v421
    %v423 = vadd.f32 %v422, 1.0
    %v424 = vlog2.pop %v423
    %v425 = vmul.f32 %v424, 0.6931472
    %v426 = vmul.f32 -0.5, %v422
    %v427 = vadd.f32 %v426, 1.0
    %v428 = vmul.f32 %v427, %v422
    %v429 = vand.u32 2147483647, %v422
    %vm430 = vcmp.lt.f32.partialorder %v429, 0.0004427343
    %v431 = vsel %vm430, %v428, %v425
    %v432 = vsel %vm419, %v416, %v431
    %433 = vxpose.xlu0.b32.start [1/16] %v432, 128
    %434 = vxpose.xlu0.b32.cont [2/16] 0.0, 128
    %435 = vxpose.xlu0.b32.cont [3/16] 0.0, 128
    %436 = vxpose.xlu0.b32.cont [4/16] 0.0, 128
    %437 = vxpose.xlu0.b32.cont [5/16] 0.0, 128
    %438 = vxpose.xlu0.b32.cont [6/16] 0.0, 128
    %439 = vxpose.xlu0.b32.cont [7/16] 0.0, 128
    %440 = vxpose.xlu0.b32.cont [8/16] 0.0, 128
    %441 = vxpose.xlu0.b32.cont [9/16] 0.0, 128
    %442 = vxpose.xlu0.b32.cont [10/16] 0.0, 128
    %443 = vxpose.xlu0.b32.cont [11/16] 0.0, 128
    %444 = vxpose.xlu0.b32.cont [12/16] 0.0, 128
    %445 = vxpose.xlu0.b32.cont [13/16] 0.0, 128
    %446 = vxpose.xlu0.b32.cont [14/16] 0.0, 128
    %447 = vxpose.xlu0.b32.cont [15/16] 0.0, 128
    %448 = vxpose.xlu0.b32.end [16/16] 0.0, 128
    %v449 = vpop.trf.xlu0
    %v450 = vpop.trf.xlu0
    %v451 = vpop.trf.xlu0
    %v452 = vpop.trf.xlu0
    %v453 = vpop.trf.xlu0
    %v454 = vpop.trf.xlu0
    %v455 = vpop.trf.xlu0
    %v456 = vpop.trf.xlu0
    %v457 = vpop.trf.xlu0
    %v458 = vpop.trf.xlu0
    %v459 = vpop.trf.xlu0
    %v460 = vpop.trf.xlu0
    %v461 = vpop.trf.xlu0
    %v462 = vpop.trf.xlu0
    %v463 = vpop.trf.xlu0
    %v464 = vpop.trf.xlu0
    %vm465 = vcmask 64512
    %466 = vst.msk [vmem:[#allocation2] sm:$0xff] %vm465, %v449
    %467 = vst.msk [vmem:[#allocation2 + $0x8] sm:$0xff] %vm465, %v450
    %468 = vst.msk [vmem:[#allocation2 + $0x10] sm:$0xff] %vm465, %v451
    %469 = vst.msk [vmem:[#allocation2 + $0x18] sm:$0xff] %vm465, %v452
    %470 = vst.msk [vmem:[#allocation2 + $0x20] sm:$0xff] %vm465, %v453
    %471 = vst.msk [vmem:[#allocation2 + $0x28] sm:$0xff] %vm465, %v454
    %472 = vst.msk [vmem:[#allocation2 + $0x30] sm:$0xff] %vm465, %v455
    %473 = vst.msk [vmem:[#allocation2 + $0x38] sm:$0xff] %vm465, %v456
    %474 = vst.msk [vmem:[#allocation2 + $0x40] sm:$0xff] %vm465, %v457
    %475 = vst.msk [vmem:[#allocation2 + $0x48] sm:$0xff] %vm465, %v458
    %476 = vst.msk [vmem:[#allocation2 + $0x50] sm:$0xff] %vm465, %v459
    %477 = vst.msk [vmem:[#allocation2 + $0x58] sm:$0xff] %vm465, %v460
    %478 = vst.msk [vmem:[#allocation2 + $0x60] sm:$0xff] %vm465, %v461
    %479 = vst.msk [vmem:[#allocation2 + $0x68] sm:$0xff] %vm465, %v462
    %480 = vst.msk [vmem:[#allocation2 + $0x70] sm:$0xff] %vm465, %v463
    %481 = vst.msk [vmem:[#allocation2 + $0x78] sm:$0xff] %vm465, %v464
    // Predicated region
    $region30: #{tpu_custom_call.1} parent=1 // pred_check
      _
    $region31: #{tpu_custom_call.1} parent=1 // pred_check_branch
      %483 = sbr.rel (0) target = $region33
    $region32: #{tpu_custom_call.1} parent=1 // pred_region
      %s485 = ssub.s32 2048, 128
      %486 = vsyncadd [#allocation3], %s485
      %s487 = sshll.u32 [#allocation2], 4
      %s488 = int_to_ptr.vmem [resolvable:$true] %s487
      %493 = dma.vmem_to_hbm [thread:$0]  %s488, 128, %s7, [#allocation3], 128, 128, 8
    $region33: #{tpu_custom_call.1} parent=1 // pred_fallthru
      _
    // Predicated region
    $region34: #{tpu_custom_call.1} parent=1 // pred_check
      _
    $region35: #{tpu_custom_call.1} parent=1 // pred_check_branch
      %495 = sbr.rel (0) target = $region37
    $region36: #{tpu_custom_call.1} parent=1 // pred_region
      %496 = dma.done [#allocation3], 2048
    $region37: #{tpu_custom_call.1} parent=1 // pred_fallthru
      _
    %497 = vsyncpa [#allocation3], 1

</llo_original>
